<compile_context>
chip_gen: v6e
topology: v6e:2x2x1
jax: 0.10.0
libtpu: 0.0.40
codegen_flags: <defaults>
</compile_context>

<pallas_src>
import math
import jax
import jax.numpy as jnp
from jax import lax
from jax.experimental import pallas as pl
from jax.experimental.pallas import tpu as pltpu


def _round_up(x: int, m: int) -> int:
    return ((x + m - 1) // m) * m


def _gelu_exact(x):
    # nn.GELU() default: exact erf-based GELU.
    return 0.5 * x * (1.0 + lax.erf(x * jnp.float32(1.0 / math.sqrt(2.0))))


def _gelu_tanh(x):
    # tanh approximation (lands in the EUP slot instead of a long VALU erf polynomial).
    c = jnp.float32(math.sqrt(2.0 / math.pi))
    return 0.5 * x * (1.0 + jnp.tanh(c * (x + jnp.float32(0.044715) * x * x * x)))


def _make_ritz_kernel(n_layers: int, use_bf16_matmul: bool, approximate_gelu: bool):
    act = _gelu_tanh if approximate_gelu else _gelu_exact

    def ritz_kernel(x_ref, w_ref, b_ref, o_ref):
        # x_ref : (tm, dpad)              input row tile (lane-dense feature dim)
        # w_ref : (n_layers, dpad, dpad)  stacked weights, pre-transposed (y = x @ w + b),
        #                                 already bf16 when use_bf16_matmul (cast in wrapper)
        # b_ref : (n_layers, 1, dpad)     stacked biases, f32
        # o_ref : (tm, dpad)              output tile
        h = x_ref[...].astype(jnp.float32)
        for l in range(n_layers):              # static unroll: n_layers is small & known
            w = w_ref[l]                       # (dpad, dpad), dtype fixed by the wrapper
            b = b_ref[l]                       # (1, dpad) f32, static index, broadcasts over rows
            lhs = h.astype(jnp.bfloat16) if use_bf16_matmul else h
            z = jnp.dot(lhs, w, preferred_element_type=jnp.float32) + b
            h = act(z)                         # elementwise kept in f32 (v5e VPU has no bf16)
        # Residual: re-read the (still-resident) input VMEM tile instead of holding x0 live
        # across the whole layer loop (saves tm*dpad f32 of register/VMEM pressure).
        o_ref[...] = (h + x_ref[...].astype(jnp.float32)).astype(o_ref.dtype)

    return ritz_kernel


def ritz_layer(x, w_stacked, b_stacked, *, tm: int = 512,
               use_bf16_matmul: bool = True, approximate_gelu: bool = False,
               core_parallel: bool = False):
    """RitzLayer forward.

    x: (N, dim); w_stacked: (n_layers, dim, dim) pre-transposed so y = x @ w + b;
    b_stacked: (n_layers, dim). Returns (N, dim) with x.dtype.
    """
    N, dim = x.shape
    n_layers, din, dout = w_stacked.shape
    assert din == dim and dout == dim, "weight stack must be (n_layers, dim, dim)"

    # --- Pad feature dim to a lane-dense multiple of 128 (unmasked vst, full MXU K/N). ---
    dpad = _round_up(max(dim, 128), 128)

    # --- Balanced row-tile split (avoid dead half-tiles; >=2 tiles for 2-TC chips). ---
    n_rows = _round_up(max(N, 8), 8)
    num_tiles = max(1, -(-n_rows // max(tm, 8)))
    if n_rows >= 512:
        num_tiles = max(num_tiles, 2)
    tm_eff = _round_up(-(-n_rows // num_tiles), 8)
    n_pad = num_tiles * tm_eff

    # Zero padding keeps padded lanes exactly 0 through every layer
    # (zero weight rows/cols, zero bias, GELU(0) == 0), so the slice-back is exact.
    w_dtype = jnp.bfloat16 if use_bf16_matmul else jnp.float32
    xp = jnp.zeros((n_pad, dpad), x.dtype).at[:N, :dim].set(x)
    wp = jnp.zeros((n_layers, dpad, dpad), w_dtype).at[:, :dim, :dim].set(
        w_stacked.astype(w_dtype))
    bp = jnp.zeros((n_layers, 1, dpad), jnp.float32).at[:, 0, :dim].set(
        b_stacked.astype(jnp.float32))

    grid = (n_pad // tm_eff,)

    # --- VMEM budget (includes in-kernel intermediates; weights single-buffered). ---
    x_item = jnp.dtype(xp.dtype).itemsize
    w_item = jnp.dtype(wp.dtype).itemsize
    f32 = 4
    vmem_needed = (
        2 * tm_eff * dpad * x_item                 # input tile, double-buffered
        + 2 * tm_eff * dpad * x_item               # output tile, double-buffered
        + n_layers * dpad * dpad * w_item          # weight stack, single-buffered
        + n_layers * dpad * f32                    # biases, single-buffered
        + 4 * tm_eff * dpad * f32                  # f32 intermediates (h, z, act temps)
        + (tm_eff * dpad * 2 if use_bf16_matmul else 0)   # bf16 copy of h fed to the MXU
    )
    try:
        vmem_cap = int(pltpu.get_tpu_info().vmem_capacity_bytes)
    except Exception:
        vmem_cap = 64 << 20                        # conservative (v7x) fallback
    vmem_limit = int(min(max(2 * vmem_needed, 16 << 20), vmem_cap - (12 << 20)))

    cost = pl.CostEstimate(
        flops=2 * n_pad * dpad * dpad * n_layers,
        transcendentals=n_pad * dpad * n_layers,   # one erf/tanh per activation
        bytes_accessed=int(xp.nbytes + wp.nbytes + bp.nbytes + n_pad * dpad * x_item),
    )

    # Grid-invariant operands: single-buffer them (double-buffering is pure VMEM waste).
    invariant = dict(pipeline_mode=pl.Buffered(1))
    dim_sem = (pltpu.CORE_PARALLEL,) if core_parallel else ("parallel",)

    kernel = _make_ritz_kernel(n_layers, use_bf16_matmul, approximate_gelu)
    out = pl.pallas_call(
        kernel,
        out_shape=jax.ShapeDtypeStruct((n_pad, dpad), x.dtype),
        grid_spec=pltpu.PrefetchScalarGridSpec(
            num_scalar_prefetch=0,
            grid=grid,
            in_specs=[
                pl.BlockSpec((tm_eff, dpad), lambda i: (i, 0)),                # x row tile
                pl.BlockSpec((n_layers, dpad, dpad), lambda i: (0, 0, 0),      # weights resident
                             **invariant),
                pl.BlockSpec((n_layers, 1, dpad), lambda i: (0, 0, 0),         # biases resident
                             **invariant),
            ],
            out_specs=pl.BlockSpec((tm_eff, dpad), lambda i: (i, 0)),
        ),
        compiler_params=pltpu.CompilerParams(
            dimension_semantics=dim_sem,
            vmem_limit_bytes=vmem_limit,
        ),
        cost_estimate=cost,
    )(xp, wp, bp)

    return out[:N, :dim]


def ritz_layer_ref(x, w_stacked, b_stacked):
    """Pure-JAX reference matching the PyTorch forward (exact GELU, f32)."""
    x0 = x.astype(jnp.float32)
    h = x0
    for l in range(w_stacked.shape[0]):
        h = _gelu_exact(h @ w_stacked[l].astype(jnp.float32)
                        + b_stacked[l].astype(jnp.float32))
    return (h + x0).astype(x.dtype)


if __name__ == "__main__":
    # Small shapes consistent with the module: dim=64, n_layers=3, batch=16.
    dim = 64
    n_layers = 3
    batch = 16

    key = jax.random.PRNGKey(0)
    kx, kw, kb = jax.random.split(key, 3)

    x = jax.random.normal(kx, (batch, dim), dtype=jnp.float32)

    # nn.Linear-style init: U(-1/sqrt(dim), 1/sqrt(dim)). PyTorch weight is (out, in) and
    # Linear computes x @ W.T; pre-transpose so the kernel computes h @ w directly.
    bound = 1.0 / math.sqrt(dim)
    w_torch_layout = jax.random.uniform(
        kw, (n_layers, dim, dim), dtype=jnp.float32, minval=-bound, maxval=bound)
    w_stacked = jnp.transpose(w_torch_layout, (0, 2, 1))  # (n_layers, in, out)
    b_stacked = jax.random.uniform(
        kb, (n_layers, dim), dtype=jnp.float32, minval=-bound, maxval=bound)

    ref = ritz_layer_ref(x, w_stacked, b_stacked)
    ref_scale = float(jnp.max(jnp.abs(ref))) + 1e-6

    # f32 matmul path, exact GELU (strict validation vs. the PyTorch-equivalent reference).
    out_f32 = ritz_layer(x, w_stacked, b_stacked, use_bf16_matmul=False)
    out_f32 = jax.block_until_ready(out_f32)
    assert out_f32.shape == (batch, dim)
    assert jnp.allclose(out_f32, ref, atol=1e-5, rtol=1e-5), "f32 kernel mismatch vs reference"

    # bf16-matmul fast path (f32 accumulation) — relative (scale-aware) check.
    out_bf16 = ritz_layer(x, w_stacked, b_stacked, use_bf16_matmul=True)
    out_bf16 = jax.block_until_ready(out_bf16)
    assert out_bf16.shape == (batch, dim)
    rel_err = float(jnp.max(jnp.abs(out_bf16 - ref))) / ref_scale
    assert rel_err < 0.05, f"bf16 kernel relative error too large: {rel_err}"

    # tanh-approx GELU path (EUP transcendental; slightly different numerics by design).
    out_tanh = ritz_layer(x, w_stacked, b_stacked, use_bf16_matmul=False,
                          approximate_gelu=True)
    out_tanh = jax.block_until_ready(out_tanh)
    assert out_tanh.shape == (batch, dim)
    assert bool(jnp.all(jnp.isfinite(out_tanh)))
    assert float(jnp.max(jnp.abs(out_tanh - ref))) < 0.05, "tanh-GELU path deviates too much"

    print("KERNEL_OK")
</pallas_src>

<mosaic_0001>
module attributes {stable_mosaic.version = 11 : i64} {
  func.func @ritz_kernel(%arg0: i32, %arg1: memref<16x128xf32, #tpu.memory_space<vmem>>, %arg2: memref<3x128x128xf32, #tpu.memory_space<vmem>>, %arg3: memref<3x1x128xf32, #tpu.memory_space<vmem>>, %arg4: memref<16x128xf32, #tpu.memory_space<vmem>>) attributes {dimension_semantics = [#tpu.dimension_semantics<parallel>], iteration_bounds = array<i64: 1>, scalar_prefetch = 0 : i64, scratch_operands = 0 : i64, tpu.core_type = #tpu.core_type<tc>, window_params = [{transform_indices = @transform_0, window_bounds = array<i64: 16, 128>}, {pipeline_mode = #tpu.pipeline_mode<synchronous>, transform_indices = @transform_1, window_bounds = array<i64: 3, 128, 128>}, {pipeline_mode = #tpu.pipeline_mode<synchronous>, transform_indices = @transform_2, window_bounds = array<i64: 3, 1, 128>}, {transform_indices = @transform_3, window_bounds = array<i64: 16, 128>}]} {
    %c0 = arith.constant 0 : index
    %c0_0 = arith.constant 0 : index
    %0 = vector.load %arg1[%c0, %c0_0] : memref<16x128xf32, #tpu.memory_space<vmem>>, vector<16x128xf32>
    %c0_1 = arith.constant 0 : index
    %c0_2 = arith.constant 0 : index
    %c0_3 = arith.constant 0 : index
    %1 = vector.load %arg2[%c0_1, %c0_2, %c0_3] : memref<3x128x128xf32, #tpu.memory_space<vmem>>, vector<1x128x128xf32>
    %2 = vector.shape_cast %1 : vector<1x128x128xf32> to vector<128x128xf32>
    %c0_4 = arith.constant 0 : index
    %c0_5 = arith.constant 0 : index
    %c0_6 = arith.constant 0 : index
    %3 = vector.load %arg3[%c0_4, %c0_5, %c0_6] : memref<3x1x128xf32, #tpu.memory_space<vmem>>, vector<1x1x128xf32>
    %4 = vector.shape_cast %3 : vector<1x1x128xf32> to vector<1x128xf32>
    %cst = arith.constant dense<0.000000e+00> : vector<16x128xf32>
    %5 = tpu.matmul %0, %2, %cst {dimension_numbers = #tpu.dot_dimension_numbers<[1], [0], [0], [1], [0, 0, 1, 1], [], []>} : vector<16x128xf32>, vector<128x128xf32>, vector<16x128xf32> -> vector<16x128xf32>
    %6 = vector.broadcast %4 : vector<1x128xf32> to vector<16x128xf32>
    %7 = arith.addf %5, %6 : vector<16x128xf32>
    %cst_7 = arith.constant 5.000000e-01 : f32
    %8 = vector.broadcast %cst_7 : f32 to vector<16x128xf32>
    %9 = arith.mulf %8, %7 : vector<16x128xf32>
    %cst_8 = arith.constant 0.707106769 : f32
    %10 = vector.broadcast %cst_8 : f32 to vector<16x128xf32>
    %11 = arith.mulf %7, %10 : vector<16x128xf32>
    %12 = math.erf %11 : vector<16x128xf32>
    %cst_9 = arith.constant 1.000000e+00 : f32
    %13 = vector.broadcast %cst_9 : f32 to vector<16x128xf32>
    %14 = arith.addf %13, %12 : vector<16x128xf32>
    %15 = arith.mulf %9, %14 : vector<16x128xf32>
    %c1 = arith.constant 1 : index
    %c0_10 = arith.constant 0 : index
    %c0_11 = arith.constant 0 : index
    %16 = vector.load %arg2[%c1, %c0_10, %c0_11] : memref<3x128x128xf32, #tpu.memory_space<vmem>>, vector<1x128x128xf32>
    %17 = vector.shape_cast %16 : vector<1x128x128xf32> to vector<128x128xf32>
    %c1_12 = arith.constant 1 : index
    %c0_13 = arith.constant 0 : index
    %c0_14 = arith.constant 0 : index
    %18 = vector.load %arg3[%c1_12, %c0_13, %c0_14] : memref<3x1x128xf32, #tpu.memory_space<vmem>>, vector<1x1x128xf32>
    %19 = vector.shape_cast %18 : vector<1x1x128xf32> to vector<1x128xf32>
    %cst_15 = arith.constant dense<0.000000e+00> : vector<16x128xf32>
    %20 = tpu.matmul %15, %17, %cst_15 {dimension_numbers = #tpu.dot_dimension_numbers<[1], [0], [0], [1], [0, 0, 1, 1], [], []>} : vector<16x128xf32>, vector<128x128xf32>, vector<16x128xf32> -> vector<16x128xf32>
    %21 = vector.broadcast %19 : vector<1x128xf32> to vector<16x128xf32>
    %22 = arith.addf %20, %21 : vector<16x128xf32>
    %cst_16 = arith.constant 5.000000e-01 : f32
    %23 = vector.broadcast %cst_16 : f32 to vector<16x128xf32>
    %24 = arith.mulf %23, %22 : vector<16x128xf32>
    %cst_17 = arith.constant 0.707106769 : f32
    %25 = vector.broadcast %cst_17 : f32 to vector<16x128xf32>
    %26 = arith.mulf %22, %25 : vector<16x128xf32>
    %27 = math.erf %26 : vector<16x128xf32>
    %cst_18 = arith.constant 1.000000e+00 : f32
    %28 = vector.broadcast %cst_18 : f32 to vector<16x128xf32>
    %29 = arith.addf %28, %27 : vector<16x128xf32>
    %30 = arith.mulf %24, %29 : vector<16x128xf32>
    %c2 = arith.constant 2 : index
    %c0_19 = arith.constant 0 : index
    %c0_20 = arith.constant 0 : index
    %31 = vector.load %arg2[%c2, %c0_19, %c0_20] : memref<3x128x128xf32, #tpu.memory_space<vmem>>, vector<1x128x128xf32>
    %32 = vector.shape_cast %31 : vector<1x128x128xf32> to vector<128x128xf32>
    %c2_21 = arith.constant 2 : index
    %c0_22 = arith.constant 0 : index
    %c0_23 = arith.constant 0 : index
    %33 = vector.load %arg3[%c2_21, %c0_22, %c0_23] : memref<3x1x128xf32, #tpu.memory_space<vmem>>, vector<1x1x128xf32>
    %34 = vector.shape_cast %33 : vector<1x1x128xf32> to vector<1x128xf32>
    %cst_24 = arith.constant dense<0.000000e+00> : vector<16x128xf32>
    %35 = tpu.matmul %30, %32, %cst_24 {dimension_numbers = #tpu.dot_dimension_numbers<[1], [0], [0], [1], [0, 0, 1, 1], [], []>} : vector<16x128xf32>, vector<128x128xf32>, vector<16x128xf32> -> vector<16x128xf32>
    %36 = vector.broadcast %34 : vector<1x128xf32> to vector<16x128xf32>
    %37 = arith.addf %35, %36 : vector<16x128xf32>
    %cst_25 = arith.constant 5.000000e-01 : f32
    %38 = vector.broadcast %cst_25 : f32 to vector<16x128xf32>
    %39 = arith.mulf %38, %37 : vector<16x128xf32>
    %cst_26 = arith.constant 0.707106769 : f32
    %40 = vector.broadcast %cst_26 : f32 to vector<16x128xf32>
    %41 = arith.mulf %37, %40 : vector<16x128xf32>
    %42 = math.erf %41 : vector<16x128xf32>
    %cst_27 = arith.constant 1.000000e+00 : f32
    %43 = vector.broadcast %cst_27 : f32 to vector<16x128xf32>
    %44 = arith.addf %43, %42 : vector<16x128xf32>
    %45 = arith.mulf %39, %44 : vector<16x128xf32>
    %c0_28 = arith.constant 0 : index
    %c0_29 = arith.constant 0 : index
    %46 = vector.load %arg1[%c0_28, %c0_29] : memref<16x128xf32, #tpu.memory_space<vmem>>, vector<16x128xf32>
    %47 = arith.addf %45, %46 : vector<16x128xf32>
    %c0_30 = arith.constant 0 : index
    %c0_31 = arith.constant 0 : index
    %48 = vector.load %arg4[%c0_30, %c0_31] : memref<16x128xf32, #tpu.memory_space<vmem>>, vector<16x128xf32>
    tpu.vector_store %arg4[%c0_30, %c0_31], %47 {strides = array<i32>} : memref<16x128xf32, #tpu.memory_space<vmem>>, vector<16x128xf32>,
    return
  }
  func.func @transform_0(%arg0: i32) -> (i32, i32) {
    %c0_i32 = arith.constant 0 : i32
    %c0_i32_0 = arith.constant 0 : i32
    return %arg0, %c0_i32 : i32, i32
  }
  func.func @transform_1(%arg0: i32) -> (i32, i32, i32) {
    %c0_i32 = arith.constant 0 : i32
    %c0_i32_0 = arith.constant 0 : i32
    %c0_i32_1 = arith.constant 0 : i32
    %c0_i32_2 = arith.constant 0 : i32
    return %c0_i32, %c0_i32_0, %c0_i32_1 : i32, i32, i32
  }
  func.func @transform_2(%arg0: i32) -> (i32, i32, i32) {
    %c0_i32 = arith.constant 0 : i32
    %c0_i32_0 = arith.constant 0 : i32
    %c0_i32_1 = arith.constant 0 : i32
    %c0_i32_2 = arith.constant 0 : i32
    return %c0_i32, %c0_i32_0, %c0_i32_1 : i32, i32, i32
  }
  func.func @transform_3(%arg0: i32) -> (i32, i32) {
    %c0_i32 = arith.constant 0 : i32
    %c0_i32_0 = arith.constant 0 : i32
    return %arg0, %c0_i32 : i32, i32
  }
}

</mosaic_0001>

<llo_original>
// kernel: tpu_custom_call.1
$region0: #{tpu_custom_call.1}
  #allocation0 [shape = 'u32[]', space=smem, size = 0x4, offset = 0x4, fixed_abs, tag = 'smem constant byte address 0x4 - core index']
  #allocation1 [shape = 'u32[144,128]{1,0:T(1,128)}', space=vmem, size = 0x12000, scoped, tag = 'internal scratch']
  %s0 = inlined_call_operand.hbm [shape: f32[16,128], index: 0, kind: input, shape index: {}]
  %s1 = inlined_call_operand.hbm [shape: f32[3,128,128], index: 1, kind: input, shape index: {}]
  %s2 = inlined_call_operand.vmem [shape: f32[3,1,128], index: 2, kind: input, shape index: {}]
  %s3 = inlined_call_operand.hbm [shape: f32[16,128], index: 3, kind: output, shape index: {}]
  %s4 = sld [smem:[#allocation0]]
  $region30: #{tpu_custom_call.1} parent=0
    _
  %s6 = ssub.s32 1, %s4
  %s7 = scalar_select 0, %s6, %s4
  $region1: #{tpu_custom_call.1} parent=0
    #allocation2 [shape = 'u8[8192]{0}', space=vmem, size = 0x2000, scoped, tag = 'input window, operand 0, single buffered']
    #allocation3 [shape = 's32[1]{0}', space=sflag, size = 0x4, scoped, tag = 'scoped memory for tpu_custom_call.1']
    #allocation4 [shape = 's32[1]{0}', space=sflag, size = 0x4, scoped, tag = 'scoped memory for tpu_custom_call.1']
    #allocation5 [shape = 'u8[196608]{0}', space=vmem, size = 0x30000, scoped, tag = 'input window, operand 1, single buffered']
    #allocation6 [shape = 's32[1]{0}', space=sflag, size = 0x4, scoped, tag = 'scoped memory for tpu_custom_call.1']
    #allocation7 [shape = 'u8[8192]{0}', space=vmem, size = 0x2000, scoped, tag = 'output window, operand 0, single buffered']
    %8 = vsyncpa [#allocation3], 0
    %9 = vsyncpa [#allocation6], 0
    %10 = vsyncpa [#allocation4], 0
    // Predicated region
    $region2: #{tpu_custom_call.1} parent=1 // pred_check
      _
    $region3: #{tpu_custom_call.1} parent=1 // pred_check_branch
      %12 = sbr.rel (0) target = $region5
    $region4: #{tpu_custom_call.1} parent=1 // pred_region
      %s14 = ssub.s32 256, 256
      %15 = vsyncadd [#allocation3], %s14
      %s16 = sshll.u32 [#allocation2], 4
      %s17 = int_to_ptr.vmem [resolvable:$true] %s16
      %22 = dma.hbm_to_vmem [thread:$0]  %s0, 256, %s17, [#allocation3], 128, 128, 8
    $region5: #{tpu_custom_call.1} parent=1 // pred_fallthru
      _
    // Predicated region
    $region6: #{tpu_custom_call.1} parent=1 // pred_check
      _
    $region7: #{tpu_custom_call.1} parent=1 // pred_check_branch
      %24 = sbr.rel (0) target = $region9
    $region8: #{tpu_custom_call.1} parent=1 // pred_region
      %s26 = ssub.s32 6144, 6144
      %27 = vsyncadd [#allocation6], %s26
      %s28 = sshll.u32 [#allocation5], 4
      %s29 = int_to_ptr.vmem [resolvable:$true] %s28
      %34 = dma.hbm_to_vmem [thread:$0]  %s1, 6144, %s29, [#allocation6], 128, 128, 8
    $region9: #{tpu_custom_call.1} parent=1 // pred_fallthru
      _
    // Predicated region
    $region10: #{tpu_custom_call.1} parent=1 // pred_check
      _
    $region11: #{tpu_custom_call.1} parent=1 // pred_check_branch
      %36 = sbr.rel (0) target = $region13
    $region12: #{tpu_custom_call.1} parent=1 // pred_region
      _
    $region13: #{tpu_custom_call.1} parent=1 // pred_fallthru
      _
    // Predicated region
    $region14: #{tpu_custom_call.1} parent=1 // pred_check
      _
    $region15: #{tpu_custom_call.1} parent=1 // pred_check_branch
      %38 = sbr.rel (0) target = $region17
    $region16: #{tpu_custom_call.1} parent=1 // pred_region
      %39 = dma.done [#allocation3], 256
    $region17: #{tpu_custom_call.1} parent=1 // pred_fallthru
      _
    // Predicated region
    $region18: #{tpu_custom_call.1} parent=1 // pred_check
      _
    $region19: #{tpu_custom_call.1} parent=1 // pred_check_branch
      %41 = sbr.rel (0) target = $region21
    $region20: #{tpu_custom_call.1} parent=1 // pred_region
      %42 = dma.done [#allocation6], 6144
    $region21: #{tpu_custom_call.1} parent=1 // pred_fallthru
      _
    %v43 = vld [vmem:[#allocation2] sm:$0xff]
    %v44 = vld [vmem:[#allocation2 + $0x8] sm:$0xff]
    %v45 = vld [vmem:[#allocation5] sm:$0xff]
    %v46 = vld [vmem:[#allocation5 + $0x8] sm:$0xff]
    %v47 = vld [vmem:[#allocation5 + $0x10] sm:$0xff]
    %v48 = vld [vmem:[#allocation5 + $0x18] sm:$0xff]
    %v49 = vld [vmem:[#allocation5 + $0x20] sm:$0xff]
    %v50 = vld [vmem:[#allocation5 + $0x28] sm:$0xff]
    %v51 = vld [vmem:[#allocation5 + $0x30] sm:$0xff]
    %v52 = vld [vmem:[#allocation5 + $0x38] sm:$0xff]
    %v53 = vld [vmem:[#allocation5 + $0x40] sm:$0xff]
    %v54 = vld [vmem:[#allocation5 + $0x48] sm:$0xff]
    %v55 = vld [vmem:[#allocation5 + $0x50] sm:$0xff]
    %v56 = vld [vmem:[#allocation5 + $0x58] sm:$0xff]
    %v57 = vld [vmem:[#allocation5 + $0x60] sm:$0xff]
    %v58 = vld [vmem:[#allocation5 + $0x68] sm:$0xff]
    %v59 = vld [vmem:[#allocation5 + $0x70] sm:$0xff]
    %v60 = vld [vmem:[#allocation5 + $0x78] sm:$0xff]
    %v61 = vld [vmem:[%s2] sm:$0x1]
    %v63 = vlaneseq
    %v64 = vshrl.u32 %v63, 7
    %v65 = vsub.s32 0, %v64
    %v66 = vrot.slane %v61, %v65
    %68 = vmatprep.subr.mxu0 0.0
    %69 = vmatpush1.msra.mxu0 %v60
    %70 = vmatprep.subr.mxu0 0.0
    %71 = vmatpush1.msra.mxu0 %v59
    %72 = vmatprep.subr.mxu0 0.0
    %73 = vmatpush1.msra.mxu0 %v58
    %74 = vmatprep.subr.mxu0 0.0
    %75 = vmatpush1.msra.mxu0 %v57
    %76 = vmatprep.subr.mxu0 0.0
    %77 = vmatpush1.msra.mxu0 %v56
    %78 = vmatprep.subr.mxu0 0.0
    %79 = vmatpush1.msra.mxu0 %v55
    %80 = vmatprep.subr.mxu0 0.0
    %81 = vmatpush1.msra.mxu0 %v54
    %82 = vmatprep.subr.mxu0 0.0
    %83 = vmatpush1.msra.mxu0 %v53
    %84 = vmatprep.subr.mxu0 0.0
    %85 = vmatpush1.msra.mxu0 %v52
    %86 = vmatprep.subr.mxu0 0.0
    %87 = vmatpush1.msra.mxu0 %v51
    %88 = vmatprep.subr.mxu0 0.0
    %89 = vmatpush1.msra.mxu0 %v50
    %90 = vmatprep.subr.mxu0 0.0
    %91 = vmatpush1.msra.mxu0 %v49
    %92 = vmatprep.subr.mxu0 0.0
    %93 = vmatpush1.msra.mxu0 %v48
    %94 = vmatprep.subr.mxu0 0.0
    %95 = vmatpush1.msra.mxu0 %v47
    %96 = vmatprep.subr.mxu0 0.0
    %97 = vmatpush1.msra.mxu0 %v46
    %98 = vmatprep.subr.mxu0 0.0
    %99 = vmatpush1.msra.mxu0 %v45
    %100 = vmatprep.subr.mxu0 0.0
    %101 = vmatpush2.msra.mxu0 0.0
    %102 = vmatprep.subr.mxu0 0.0
    %103 = vmatpush2.msra.mxu0 0.0
    %104 = vmatprep.subr.mxu0 0.0
    %105 = vmatpush2.msra.mxu0 0.0
    %106 = vmatprep.subr.mxu0 0.0
    %107 = vmatpush2.msra.mxu0 0.0
    %108 = vmatprep.subr.mxu0 0.0
    %109 = vmatpush2.msra.mxu0 0.0
    %110 = vmatprep.subr.mxu0 0.0
    %111 = vmatpush2.msra.mxu0 0.0
    %112 = vmatprep.subr.mxu0 0.0
    %113 = vmatpush2.msra.mxu0 0.0
    %114 = vmatprep.subr.mxu0 0.0
    %115 = vmatpush2.msra.mxu0 0.0
    %116 = vmatprep.subr.mxu0 0.0
    %117 = vmatpush2.msra.mxu0 0.0
    %118 = vmatprep.subr.mxu0 0.0
    %119 = vmatpush2.msra.mxu0 0.0
    %120 = vmatprep.subr.mxu0 0.0
    %121 = vmatpush2.msra.mxu0 0.0
    %122 = vmatprep.subr.mxu0 0.0
    %123 = vmatpush2.msra.mxu0 0.0
    %124 = vmatprep.subr.mxu0 0.0
    %125 = vmatpush2.msra.mxu0 0.0
    %126 = vmatprep.subr.mxu0 0.0
    %127 = vmatpush2.msra.mxu0 0.0
    %128 = vmatprep.subr.mxu0 0.0
    %129 = vmatpush2.msra.mxu0 0.0
    %130 = vmatprep.subr.mxu0 0.0
    %131 = vmatpush2.msra.mxu0 0.0
    %132 = vmatprep.mubr.f32.mxu0 0.0
    %133 = vmatmul.mubr.f32.gmra.mxu0 %v43
    %v134 = vpop.f32.mrf.mxu0
    %v135 = vadd.f32 %v66, %v134
    %v136 = vpop.f32.mrf.mxu0
    %137 = vmatprep.mubr.f32.mxu0 0.0
    %138 = vmatmul.mubr.f32.gmra.mxu0 %v44
    %v139 = vpop.f32.mrf.mxu0
    %v140 = vadd.f32 %v66, %v139
    %v141 = vpop.f32.mrf.mxu0
    %142 = vdwg.mxu0
    %v143 = vmul.f32 %v135, 0.5
    %v144 = vmul.f32 %v140, 0.5
    %v145 = vmul.f32 %v135, 0.70710677
    %v146 = vmul.f32 %v140, 0.70710677
    %v147 = verf.f32.pop %v145
    %v148 = verf.f32.pop %v146
    %v149 = vadd.f32 %v147, 1.0
    %v150 = vadd.f32 %v148, 1.0
    %v151 = vmul.f32 %v143, %v149
    %v152 = vmul.f32 %v144, %v150
    %s153 = scalar_lea.vmem [#allocation5], 128
    %v154 = vld [vmem:[%s153] sm:$0xff]
    %v155 = vld [vmem:[%s153 + $0x8] sm:$0xff]
    %v156 = vld [vmem:[%s153 + $0x10] sm:$0xff]
    %v157 = vld [vmem:[%s153 + $0x18] sm:$0xff]
    %v158 = vld [vmem:[%s153 + $0x20] sm:$0xff]
    %v159 = vld [vmem:[%s153 + $0x28] sm:$0xff]
    %v160 = vld [vmem:[%s153 + $0x30] sm:$0xff]
    %v161 = vld [vmem:[%s153 + $0x38] sm:$0xff]
    %v162 = vld [vmem:[%s153 + $0x40] sm:$0xff]
    %v163 = vld [vmem:[%s153 + $0x48] sm:$0xff]
    %v164 = vld [vmem:[%s153 + $0x50] sm:$0xff]
    %v165 = vld [vmem:[%s153 + $0x58] sm:$0xff]
    %v166 = vld [vmem:[%s153 + $0x60] sm:$0xff]
    %v167 = vld [vmem:[%s153 + $0x68] sm:$0xff]
    %v168 = vld [vmem:[%s153 + $0x70] sm:$0xff]
    %v169 = vld [vmem:[%s153 + $0x78] sm:$0xff]
    %s170 = scalar_lea.vmem %s2, 1
    %v171 = vld [vmem:[%s170] sm:$0x1]
    %v173 = vlaneseq
    %v174 = vshrl.u32 %v173, 7
    %v175 = vsub.s32 0, %v174
    %v176 = vrot.slane %v171, %v175
    %178 = vmatprep.subr.mxu0 0.0
    %179 = vmatpush1.msra.mxu0 %v169
    %180 = vmatprep.subr.mxu0 0.0
    %181 = vmatpush1.msra.mxu0 %v168
    %182 = vmatprep.subr.mxu0 0.0
    %183 = vmatpush1.msra.mxu0 %v167
    %184 = vmatprep.subr.mxu0 0.0
    %185 = vmatpush1.msra.mxu0 %v166
    %186 = vmatprep.subr.mxu0 0.0
    %187 = vmatpush1.msra.mxu0 %v165
    %188 = vmatprep.subr.mxu0 0.0
    %189 = vmatpush1.msra.mxu0 %v164
    %190 = vmatprep.subr.mxu0 0.0
    %191 = vmatpush1.msra.mxu0 %v163
    %192 = vmatprep.subr.mxu0 0.0
    %193 = vmatpush1.msra.mxu0 %v162
    %194 = vmatprep.subr.mxu0 0.0
    %195 = vmatpush1.msra.mxu0 %v161
    %196 = vmatprep.subr.mxu0 0.0
    %197 = vmatpush1.msra.mxu0 %v160
    %198 = vmatprep.subr.mxu0 0.0
    %199 = vmatpush1.msra.mxu0 %v159
    %200 = vmatprep.subr.mxu0 0.0
    %201 = vmatpush1.msra.mxu0 %v158
    %202 = vmatprep.subr.mxu0 0.0
    %203 = vmatpush1.msra.mxu0 %v157
    %204 = vmatprep.subr.mxu0 0.0
    %205 = vmatpush1.msra.mxu0 %v156
    %206 = vmatprep.subr.mxu0 0.0
    %207 = vmatpush1.msra.mxu0 %v155
    %208 = vmatprep.subr.mxu0 0.0
    %209 = vmatpush1.msra.mxu0 %v154
    %210 = vmatprep.subr.mxu0 0.0
    %211 = vmatpush2.msra.mxu0 0.0
    %212 = vmatprep.subr.mxu0 0.0
    %213 = vmatpush2.msra.mxu0 0.0
    %214 = vmatprep.subr.mxu0 0.0
    %215 = vmatpush2.msra.mxu0 0.0
    %216 = vmatprep.subr.mxu0 0.0
    %217 = vmatpush2.msra.mxu0 0.0
    %218 = vmatprep.subr.mxu0 0.0
    %219 = vmatpush2.msra.mxu0 0.0
    %220 = vmatprep.subr.mxu0 0.0
    %221 = vmatpush2.msra.mxu0 0.0
    %222 = vmatprep.subr.mxu0 0.0
    %223 = vmatpush2.msra.mxu0 0.0
    %224 = vmatprep.subr.mxu0 0.0
    %225 = vmatpush2.msra.mxu0 0.0
    %226 = vmatprep.subr.mxu0 0.0
    %227 = vmatpush2.msra.mxu0 0.0
    %228 = vmatprep.subr.mxu0 0.0
    %229 = vmatpush2.msra.mxu0 0.0
    %230 = vmatprep.subr.mxu0 0.0
    %231 = vmatpush2.msra.mxu0 0.0
    %232 = vmatprep.subr.mxu0 0.0
    %233 = vmatpush2.msra.mxu0 0.0
    %234 = vmatprep.subr.mxu0 0.0
    %235 = vmatpush2.msra.mxu0 0.0
    %236 = vmatprep.subr.mxu0 0.0
    %237 = vmatpush2.msra.mxu0 0.0
    %238 = vmatprep.subr.mxu0 0.0
    %239 = vmatpush2.msra.mxu0 0.0
    %240 = vmatprep.subr.mxu0 0.0
    %241 = vmatpush2.msra.mxu0 0.0
    %242 = vmatprep.mubr.f32.mxu0 0.0
    %243 = vmatmul.mubr.f32.gmra.mxu0 %v151
    %v244 = vpop.f32.mrf.mxu0
    %v245 = vadd.f32 %v176, %v244
    %v246 = vpop.f32.mrf.mxu0
    %247 = vmatprep.mubr.f32.mxu0 0.0
    %248 = vmatmul.mubr.f32.gmra.mxu0 %v152
    %v249 = vpop.f32.mrf.mxu0
    %v250 = vadd.f32 %v176, %v249
    %v251 = vpop.f32.mrf.mxu0
    %252 = vdwg.mxu0
    %v253 = vmul.f32 %v245, 0.5
    %v254 = vmul.f32 %v250, 0.5
    %v255 = vmul.f32 %v245, 0.70710677
    %v256 = vmul.f32 %v250, 0.70710677
    %v257 = verf.f32.pop %v255
    %v258 = verf.f32.pop %v256
    %v259 = vadd.f32 %v257, 1.0
    %v260 = vadd.f32 %v258, 1.0
    %v261 = vmul.f32 %v253, %v259
    %v262 = vmul.f32 %v254, %v260
    %s263 = scalar_lea.vmem [#allocation5], 256
    %v264 = vld [vmem:[%s263] sm:$0xff]
    %v265 = vld [vmem:[%s263 + $0x8] sm:$0xff]
    %v266 = vld [vmem:[%s263 + $0x10] sm:$0xff]
    %v267 = vld [vmem:[%s263 + $0x18] sm:$0xff]
    %v268 = vld [vmem:[%s263 + $0x20] sm:$0xff]
    %v269 = vld [vmem:[%s263 + $0x28] sm:$0xff]
    %v270 = vld [vmem:[%s263 + $0x30] sm:$0xff]
    %v271 = vld [vmem:[%s263 + $0x38] sm:$0xff]
    %v272 = vld [vmem:[%s263 + $0x40] sm:$0xff]
    %v273 = vld [vmem:[%s263 + $0x48] sm:$0xff]
    %v274 = vld [vmem:[%s263 + $0x50] sm:$0xff]
    %v275 = vld [vmem:[%s263 + $0x58] sm:$0xff]
    %v276 = vld [vmem:[%s263 + $0x60] sm:$0xff]
    %v277 = vld [vmem:[%s263 + $0x68] sm:$0xff]
    %v278 = vld [vmem:[%s263 + $0x70] sm:$0xff]
    %v279 = vld [vmem:[%s263 + $0x78] sm:$0xff]
    %s280 = scalar_lea.vmem %s2, 2
    %v281 = vld [vmem:[%s280] sm:$0x1]
    %v283 = vlaneseq
    %v284 = vshrl.u32 %v283, 7
    %v285 = vsub.s32 0, %v284
    %v286 = vrot.slane %v281, %v285
    %288 = vmatprep.subr.mxu0 0.0
    %289 = vmatpush1.msra.mxu0 %v279
    %290 = vmatprep.subr.mxu0 0.0
    %291 = vmatpush1.msra.mxu0 %v278
    %292 = vmatprep.subr.mxu0 0.0
    %293 = vmatpush1.msra.mxu0 %v277
    %294 = vmatprep.subr.mxu0 0.0
    %295 = vmatpush1.msra.mxu0 %v276
    %296 = vmatprep.subr.mxu0 0.0
    %297 = vmatpush1.msra.mxu0 %v275
    %298 = vmatprep.subr.mxu0 0.0
    %299 = vmatpush1.msra.mxu0 %v274
    %300 = vmatprep.subr.mxu0 0.0
    %301 = vmatpush1.msra.mxu0 %v273
    %302 = vmatprep.subr.mxu0 0.0
    %303 = vmatpush1.msra.mxu0 %v272
    %304 = vmatprep.subr.mxu0 0.0
    %305 = vmatpush1.msra.mxu0 %v271
    %306 = vmatprep.subr.mxu0 0.0
    %307 = vmatpush1.msra.mxu0 %v270
    %308 = vmatprep.subr.mxu0 0.0
    %309 = vmatpush1.msra.mxu0 %v269
    %310 = vmatprep.subr.mxu0 0.0
    %311 = vmatpush1.msra.mxu0 %v268
    %312 = vmatprep.subr.mxu0 0.0
    %313 = vmatpush1.msra.mxu0 %v267
    %314 = vmatprep.subr.mxu0 0.0
    %315 = vmatpush1.msra.mxu0 %v266
    %316 = vmatprep.subr.mxu0 0.0
    %317 = vmatpush1.msra.mxu0 %v265
    %318 = vmatprep.subr.mxu0 0.0
    %319 = vmatpush1.msra.mxu0 %v264
    %320 = vmatprep.subr.mxu0 0.0
    %321 = vmatpush2.msra.mxu0 0.0
    %322 = vmatprep.subr.mxu0 0.0
    %323 = vmatpush2.msra.mxu0 0.0
    %324 = vmatprep.subr.mxu0 0.0
    %325 = vmatpush2.msra.mxu0 0.0
    %326 = vmatprep.subr.mxu0 0.0
    %327 = vmatpush2.msra.mxu0 0.0
    %328 = vmatprep.subr.mxu0 0.0
    %329 = vmatpush2.msra.mxu0 0.0
    %330 = vmatprep.subr.mxu0 0.0
    %331 = vmatpush2.msra.mxu0 0.0
    %332 = vmatprep.subr.mxu0 0.0
    %333 = vmatpush2.msra.mxu0 0.0
    %334 = vmatprep.subr.mxu0 0.0
    %335 = vmatpush2.msra.mxu0 0.0
    %336 = vmatprep.subr.mxu0 0.0
    %337 = vmatpush2.msra.mxu0 0.0
    %338 = vmatprep.subr.mxu0 0.0
    %339 = vmatpush2.msra.mxu0 0.0
    %340 = vmatprep.subr.mxu0 0.0
    %341 = vmatpush2.msra.mxu0 0.0
    %342 = vmatprep.subr.mxu0 0.0
    %343 = vmatpush2.msra.mxu0 0.0
    %344 = vmatprep.subr.mxu0 0.0
    %345 = vmatpush2.msra.mxu0 0.0
    %346 = vmatprep.subr.mxu0 0.0
    %347 = vmatpush2.msra.mxu0 0.0
    %348 = vmatprep.subr.mxu0 0.0
    %349 = vmatpush2.msra.mxu0 0.0
    %350 = vmatprep.subr.mxu0 0.0
    %351 = vmatpush2.msra.mxu0 0.0
    %352 = vmatprep.mubr.f32.mxu0 0.0
    %353 = vmatmul.mubr.f32.gmra.mxu0 %v261
    %v354 = vpop.f32.mrf.mxu0
    %v355 = vadd.f32 %v286, %v354
    %v356 = vpop.f32.mrf.mxu0
    %357 = vmatprep.mubr.f32.mxu0 0.0
    %358 = vmatmul.mubr.f32.gmra.mxu0 %v262
    %v359 = vpop.f32.mrf.mxu0
    %v360 = vadd.f32 %v286, %v359
    %v361 = vpop.f32.mrf.mxu0
    %362 = vdwg.mxu0
    %v363 = vmul.f32 %v355, 0.5
    %v364 = vmul.f32 %v360, 0.5
    %v365 = vmul.f32 %v355, 0.70710677
    %v366 = vmul.f32 %v360, 0.70710677
    %v367 = verf.f32.pop %v365
    %v368 = verf.f32.pop %v366
    %v369 = vadd.f32 %v367, 1.0
    %v370 = vadd.f32 %v368, 1.0
    %v371 = vmul.f32 %v363, %v369
    %v372 = vmul.f32 %v364, %v370
    %v373 = vadd.f32 %v371, %v43
    %v374 = vadd.f32 %v372, %v44
    %375 = vst [vmem:[#allocation7] sm:$0xff] %v373
    %376 = vst [vmem:[#allocation7 + $0x8] sm:$0xff] %v374
    // Predicated region
    $region22: #{tpu_custom_call.1} parent=1 // pred_check
      _
    $region23: #{tpu_custom_call.1} parent=1 // pred_check_branch
      %378 = sbr.rel (0) target = $region25
    $region24: #{tpu_custom_call.1} parent=1 // pred_region
      %s380 = ssub.s32 256, 256
      %381 = vsyncadd [#allocation4], %s380
      %s382 = sshll.u32 [#allocation7], 4
      %s383 = int_to_ptr.vmem [resolvable:$true] %s382
      %388 = dma.vmem_to_hbm [thread:$0]  %s383, 256, %s3, [#allocation4], 128, 128, 8
    $region25: #{tpu_custom_call.1} parent=1 // pred_fallthru
      _
    // Predicated region
    $region26: #{tpu_custom_call.1} parent=1 // pred_check
      _
    $region27: #{tpu_custom_call.1} parent=1 // pred_check_branch
      %390 = sbr.rel (0) target = $region29
    $region28: #{tpu_custom_call.1} parent=1 // pred_region
      %391 = dma.done [#allocation4], 256
    $region29: #{tpu_custom_call.1} parent=1 // pred_fallthru
      _
    %392 = vsyncpa [#allocation3], 1
    %393 = vsyncpa [#allocation6], 1
    %394 = vsyncpa [#allocation4], 1

</llo_original>
